<compile_context>
chip_gen: v5e
topology: v5e:2x2
jax: 0.10.0
libtpu: 0.0.40
codegen_flags: <defaults>
</compile_context>

<pallas_src>
import jax
import jax.numpy as jnp
from jax.experimental import pallas as pl
from jax.experimental.pallas import tpu as pltpu

_EPS = 1e-5
_LANES = 128
_VMEM_LIMIT = 32 * 1024 * 1024  # scoped-VMEM budget in bytes (conservative for v7x)


def _round_up(x, m):
    return (x + m - 1) // m * m


def _cparams(semantics):
    return pltpu.CompilerParams(dimension_semantics=semantics,
                                vmem_limit_bytes=_VMEM_LIMIT)


# ---------------------------------------------------------------------------
# Pallas kernels
# ---------------------------------------------------------------------------
def _conv_stats_kernel(x_ref, w_ref, y_ref, s_ref, ss_ref, sacc_ref, ssacc_ref):
    """One row tile of conv-as-matmul; accumulate per-channel sum / sum-of-squares."""
    i = pl.program_id(0)

    @pl.when(i == 0)
    def _():
        sacc_ref[...] = jnp.zeros_like(sacc_ref)
        ssacc_ref[...] = jnp.zeros_like(ssacc_ref)

    # bf16 x bf16 -> f32 accumulate on the MXU, single K = kh*kw*Cin contraction.
    y = jnp.dot(x_ref[...], w_ref[...], preferred_element_type=jnp.float32)
    y_ref[...] = y

    sacc_ref[...] += jnp.sum(y, axis=0, keepdims=True)
    ssacc_ref[...] += jnp.sum(y * y, axis=0, keepdims=True)

    @pl.when(i == pl.num_programs(0) - 1)
    def _():
        s_ref[...] = sacc_ref[...]
        ss_ref[...] = ssacc_ref[...]


def _bn_relu_kernel(y_ref, sc_ref, sh_ref, o_ref):
    o_ref[...] = jnp.maximum(y_ref[...] * sc_ref[...] + sh_ref[...], 0.0).astype(o_ref.dtype)


def _bn_add_relu_kernel(y_ref, sc_ref, sh_ref, skip_ref, o_ref):
    o_ref[...] = jnp.maximum(y_ref[...] * sc_ref[...] + sh_ref[...] + skip_ref[...], 0.0)


def _bn_add_bn_relu_kernel(y_ref, sc2_ref, sh2_ref, s_ref, scd_ref, shd_ref, o_ref):
    main = y_ref[...] * sc2_ref[...] + sh2_ref[...]
    skip = s_ref[...] * scd_ref[...] + shd_ref[...]
    o_ref[...] = jnp.maximum(main + skip, 0.0)


# ---------------------------------------------------------------------------
# pallas_call launchers
# ---------------------------------------------------------------------------
def _conv_with_stats(x2d, w2d, tm):
    """x2d: (Mpad, K) bf16, w2d: (K, Cpad) bf16 -> raw conv (Mpad, Cpad) f32, sum, sumsq."""
    mp, k = x2d.shape
    cp = w2d.shape[1]
    tile = pl.BlockSpec((tm, cp), lambda i: (i, 0))
    vec = pl.BlockSpec((1, cp), lambda i: (0, 0))
    return pl.pallas_call(
        _conv_stats_kernel,
        grid=(mp // tm,),
        in_specs=[pl.BlockSpec((tm, k), lambda i: (i, 0)),   # activation tiles stream
                  pl.BlockSpec((k, cp), lambda i: (0, 0))],  # weights: DMA'd once, resident
        out_specs=(tile, vec, vec),
        out_shape=(jax.ShapeDtypeStruct((mp, cp), jnp.float32),
                   jax.ShapeDtypeStruct((1, cp), jnp.float32),
                   jax.ShapeDtypeStruct((1, cp), jnp.float32)),
        scratch_shapes=[pltpu.VMEM((1, cp), jnp.float32),
                        pltpu.VMEM((1, cp), jnp.float32)],
        compiler_params=_cparams(("arbitrary",)),            # sequential stats reduction
    )(x2d, w2d)


def _bn_relu(y, scale, shift, tm, out_dtype):
    mp, cp = y.shape
    tile = pl.BlockSpec((tm, cp), lambda i: (i, 0))
    vec = pl.BlockSpec((1, cp), lambda i: (0, 0))
    return pl.pallas_call(
        _bn_relu_kernel,
        grid=(mp // tm,),
        in_specs=[tile, vec, vec],
        out_specs=tile,
        out_shape=jax.ShapeDtypeStruct((mp, cp), out_dtype),
        compiler_params=_cparams(("parallel",)),
    )(y, scale, shift)


def _bn_add_relu(y, scale, shift, skip, tm):
    mp, cp = y.shape
    tile = pl.BlockSpec((tm, cp), lambda i: (i, 0))
    vec = pl.BlockSpec((1, cp), lambda i: (0, 0))
    return pl.pallas_call(
        _bn_add_relu_kernel,
        grid=(mp // tm,),
        in_specs=[tile, vec, vec, tile],
        out_specs=tile,
        out_shape=jax.ShapeDtypeStruct((mp, cp), jnp.float32),
        compiler_params=_cparams(("parallel",)),
    )(y, scale, shift, skip)


def _bn_add_bn_relu(y, sc2, sh2, skip_raw, scd, shd, tm):
    mp, cp = y.shape
    tile = pl.BlockSpec((tm, cp), lambda i: (i, 0))
    vec = pl.BlockSpec((1, cp), lambda i: (0, 0))
    return pl.pallas_call(
        _bn_add_bn_relu_kernel,
        grid=(mp // tm,),
        in_specs=[tile, vec, vec, tile, vec, vec],
        out_specs=tile,
        out_shape=jax.ShapeDtypeStruct((mp, cp), jnp.float32),
        compiler_params=_cparams(("parallel",)),
    )(y, sc2, sh2, skip_raw, scd, shd)


# ---------------------------------------------------------------------------
# Wrapper glue (XLA side): im2col packing, weight matrices, BN affine params
# ---------------------------------------------------------------------------
def _im2col(x_nhwc, ksize, stride, pad, dtype):
    n, h, w, c = x_nhwc.shape
    xp = jnp.pad(x_nhwc, ((0, 0), (pad, pad), (pad, pad), (0, 0)))
    ho = (h + 2 * pad - ksize) // stride + 1
    wo = (w + 2 * pad - ksize) // stride + 1
    cols = []
    for dy in range(ksize):
        for dx in range(ksize):
            cols.append(xp[:, dy:dy + stride * (ho - 1) + 1:stride,
                           dx:dx + stride * (wo - 1) + 1:stride, :])
    patches = jnp.concatenate(cols, axis=-1)              # taps ordered (dy, dx), chan inner
    return patches.reshape(n * ho * wo, ksize * ksize * c).astype(dtype), ho, wo


def _w_matrix(w_oihw, c_pad, dtype):
    co, ci, kh, kw = w_oihw.shape
    wm = jnp.transpose(w_oihw, (2, 3, 1, 0)).reshape(kh * kw * ci, co)  # rows: (dy, dx, cin)
    return jnp.pad(wm, ((0, 0), (0, c_pad - co))).astype(dtype)


def _pad_rows(a, m_pad):
    return jnp.pad(a, ((0, m_pad - a.shape[0]), (0, 0)))


def _affine_from_stats(sums, sumsq, count, gamma, beta, c_out, c_pad):
    # Train-mode BN (biased variance): scale = g*rsqrt(var+eps), shift = b - mean*scale.
    mean = sums[0] / count
    var = jnp.maximum(sumsq[0] / count - mean * mean, 0.0)
    g = jnp.pad(gamma.astype(jnp.float32), (0, c_pad - c_out))
    b = jnp.pad(beta.astype(jnp.float32), (0, c_pad - c_out))
    scale = g * jax.lax.rsqrt(var + _EPS)
    shift = b - mean * scale
    return scale.reshape(1, c_pad), shift.reshape(1, c_pad)


def _auto_tile_m(k_in, c_pad):
    # Double-buffered bf16 input tile + f32 raw-output tile; weights resident;
    # stay within ~half the scoped-VMEM limit (re-derived for v7x's smaller VMEM).
    per_row = 2 * (2 * k_in) + 2 * (4 * c_pad)
    budget = max(per_row, _VMEM_LIMIT // 2 - 2 * k_in * c_pad)
    tm = budget // per_row
    return int(min(2048, max(256, (tm // 256) * 256)))


# ---------------------------------------------------------------------------
# Forward pass (matches PyTorch resBlock.forward in train mode)
# ---------------------------------------------------------------------------
def resblock_forward(x_nchw, p, stride=1, tile_m=None):
    cout, cin = p['w1'].shape[0], p['w1'].shape[1]
    n, _, h, w = x_nchw.shape
    x = jnp.transpose(x_nchw, (0, 2, 3, 1)).astype(jnp.float32)   # NHWC
    c_pad = _round_up(cout, _LANES)                                # lane-dense channel axis

    # NOTE: conv biases b1/b2/bd are intentionally unused — they cancel exactly in
    # the train-mode BN mean subtraction.

    x1, ho, wo = _im2col(x, 3, stride, 1, jnp.bfloat16)
    m = n * ho * wo
    k1, k2 = x1.shape[1], 9 * cout

    tm = tile_m if tile_m is not None else _auto_tile_m(max(k1, k2), c_pad)
    if tm >= m:
        tm = _round_up(m, 16)
    m_pad = _round_up(m, tm)           # zero row-padding: contributes 0 to BN sums

    # ---- block[0..2]: conv3x3(stride) -> BN -> ReLU -------------------------
    y1_raw, s1, ss1 = _conv_with_stats(_pad_rows(x1, m_pad),
                                       _w_matrix(p['w1'], c_pad, jnp.bfloat16), tm)
    sc1, sh1 = _affine_from_stats(s1, ss1, m, p['g1'], p['be1'], cout, c_pad)
    y1 = _bn_relu(y1_raw, sc1, sh1, tm, jnp.bfloat16)              # (m_pad, c_pad) bf16

    # ---- block[3..4]: conv3x3(1) -> BN ---------------------------------------
    y1_nhwc = y1[:m, :cout].reshape(n, ho, wo, cout)
    x2, _, _ = _im2col(y1_nhwc, 3, 1, 1, jnp.bfloat16)
    y2_raw, s2, ss2 = _conv_with_stats(_pad_rows(x2, m_pad),
                                       _w_matrix(p['w2'], c_pad, jnp.bfloat16), tm)
    sc2, sh2 = _affine_from_stats(s2, ss2, m, p['g2'], p['be2'], cout, c_pad)

    # ---- skip path, add, ReLU ------------------------------------------------
    if stride != 1 or cin != cout:
        xd = x[:, ::stride, ::stride, :].reshape(m, cin).astype(jnp.bfloat16)
        sk_raw, sd, ssd = _conv_with_stats(_pad_rows(xd, m_pad),
                                           _w_matrix(p['wd'], c_pad, jnp.bfloat16), tm)
        scd, shd = _affine_from_stats(sd, ssd, m, p['gd'], p['bed'], cout, c_pad)
        out = _bn_add_bn_relu(y2_raw, sc2, sh2, sk_raw, scd, shd, tm)
    else:
        skip = jnp.pad(x.reshape(m, cin), ((0, m_pad - m), (0, c_pad - cin)))
        out = _bn_add_relu(y2_raw, sc2, sh2, skip, tm)

    out = out[:m, :cout].reshape(n, ho, wo, cout)
    return jnp.transpose(out, (0, 3, 1, 2))                        # back to NCHW


# ---------------------------------------------------------------------------
# Pure-JAX reference (mirrors the PyTorch module, train-mode BN, biases included)
# ---------------------------------------------------------------------------
def ref_forward(x, p, stride=1, matmul_dtype=jnp.float32):
    cout, cin = p['w1'].shape[0], p['w1'].shape[1]

    def conv(h, w, b, s, pad):
        y = jax.lax.conv_general_dilated(
            h.astype(matmul_dtype), w.astype(matmul_dtype), (s, s),
            [(pad, pad), (pad, pad)],
            dimension_numbers=('NCHW', 'OIHW', 'NCHW'),
            preferred_element_type=jnp.float32)
        return y + b.reshape(1, -1, 1, 1)

    def bn(y, g, be):
        m = jnp.mean(y, axis=(0, 2, 3), keepdims=True)
        v = jnp.mean((y - m) ** 2, axis=(0, 2, 3), keepdims=True)
        return (y - m) / jnp.sqrt(v + _EPS) * g.reshape(1, -1, 1, 1) + be.reshape(1, -1, 1, 1)

    h = jax.nn.relu(bn(conv(x, p['w1'], p['b1'], stride, 1), p['g1'], p['be1']))
    h = bn(conv(h, p['w2'], p['b2'], 1, 1), p['g2'], p['be2'])
    if stride != 1 or cin != cout:
        skip = bn(conv(x, p['wd'], p['bd'], stride, 0), p['gd'], p['bed'])
    else:
        skip = x
    return jax.nn.relu(h + skip)


def _make_params(key, cin, cout, downsample):
    ks = jax.random.split(key, 12)
    p = {
        'w1': 0.2 * jax.random.normal(ks[0], (cout, cin, 3, 3), jnp.float32),
        'b1': 0.1 * jax.random.normal(ks[1], (cout,), jnp.float32),
        'g1': 1.0 + 0.1 * jax.random.normal(ks[2], (cout,), jnp.float32),
        'be1': 0.1 * jax.random.normal(ks[3], (cout,), jnp.float32),
        'w2': 0.2 * jax.random.normal(ks[4], (cout, cout, 3, 3), jnp.float32),
        'b2': 0.1 * jax.random.normal(ks[5], (cout,), jnp.float32),
        'g2': 1.0 + 0.1 * jax.random.normal(ks[6], (cout,), jnp.float32),
        'be2': 0.1 * jax.random.normal(ks[7], (cout,), jnp.float32),
    }
    if downsample:
        p.update({
            'wd': 0.2 * jax.random.normal(ks[8], (cout, cin, 1, 1), jnp.float32),
            'bd': 0.1 * jax.random.normal(ks[9], (cout,), jnp.float32),
            'gd': 1.0 + 0.1 * jax.random.normal(ks[10], (cout,), jnp.float32),
            'bed': 0.1 * jax.random.normal(ks[11], (cout,), jnp.float32),
        })
    return p


if __name__ == "__main__":
    key = jax.random.PRNGKey(0)
    kx, kp1, kp2 = jax.random.split(key, 3)

    N, Cin, H, W, Cout = 2, 4, 16, 16, 8
    x = jax.random.normal(kx, (N, Cin, H, W), jnp.float32)

    def check(out, xin, p, stride, name):
        # Hard gate vs a precision-matched (bf16-matmul) reference; loose sanity gate
        # vs the pure-f32 PyTorch-semantics reference (bf16 MXU rounding only).
        ref_bf = ref_forward(xin, p, stride, jnp.bfloat16)
        ref_f32 = ref_forward(xin, p, stride, jnp.float32)
        err_bf = float(jnp.max(jnp.abs(out - ref_bf)))
        err_f32 = float(jnp.max(jnp.abs(out - ref_f32)))
        if err_bf > 2e-2:
            raise AssertionError(f"{name}: mismatch vs bf16-matched ref, max abs err = {err_bf}")
        if err_f32 > 1.5e-1:
            raise AssertionError(f"{name}: mismatch vs f32 ref, max abs err = {err_f32}")

    # Case 1: Cin != Cout (1x1-conv downsample skip), stride=1; tile_m=256 -> 2-step grid,
    # exercising the cross-tile BN stats accumulation.
    params = _make_params(kp1, Cin, Cout, downsample=True)
    out = jax.block_until_ready(resblock_forward(x, params, stride=1, tile_m=256))
    assert out.shape == (N, Cout, H, W), out.shape
    check(out, x, params, 1, "downsample")

    # Case 2: Cin == Cout, stride=1 (identity skip), tiled grid again.
    params_id = _make_params(kp2, Cin, Cin, downsample=False)
    out2 = jax.block_until_ready(resblock_forward(x, params_id, stride=1, tile_m=256))
    assert out2.shape == (N, Cin, H, W), out2.shape
    check(out2, x, params_id, 1, "identity")

    # Case 3: stride=2 with downsample, auto tile size (single-tile path).
    out3 = jax.block_until_ready(resblock_forward(x, params, stride=2))
    assert out3.shape == (N, Cout, H // 2, W // 2), out3.shape
    check(out3, x, params, 2, "stride2")

    print("KERNEL_OK")
</pallas_src>

<mosaic_0001>
module attributes {stable_mosaic.version = 11 : i64} {
  func.func @_conv_stats_kernel(%arg0: i32, %arg1: memref<256x36xbf16, #tpu.memory_space<vmem>>, %arg2: memref<36x128xbf16, #tpu.memory_space<vmem>>, %arg3: memref<256x128xf32, #tpu.memory_space<vmem>>, %arg4: memref<1x128xf32, #tpu.memory_space<vmem>>, %arg5: memref<1x128xf32, #tpu.memory_space<vmem>>, %arg6: memref<1x128xf32, #tpu.memory_space<vmem>>, %arg7: memref<1x128xf32, #tpu.memory_space<vmem>>) attributes {dimension_semantics = [#tpu.dimension_semantics<arbitrary>], iteration_bounds = array<i64: 2>, scalar_prefetch = 0 : i64, scratch_operands = 2 : i64, tpu.core_type = #tpu.core_type<tc>, window_params = [{transform_indices = @transform_0, window_bounds = array<i64: 256, 36>}, {pipeline_mode = #tpu.pipeline_mode<synchronous>, transform_indices = @transform_1, window_bounds = array<i64: 36, 128>}, {transform_indices = @transform_2, window_bounds = array<i64: 256, 128>}, {pipeline_mode = #tpu.pipeline_mode<synchronous>, transform_indices = @transform_3, window_bounds = array<i64: 1, 128>}, {pipeline_mode = #tpu.pipeline_mode<synchronous>, transform_indices = @transform_4, window_bounds = array<i64: 1, 128>}]} {
    %c0_i32 = arith.constant 0 : i32
    %0 = arith.cmpi eq, %arg0, %c0_i32 : i32
    %1 = arith.extui %0 : i1 to i32
    %c0_i32_0 = arith.constant 0 : i32
    %2 = arith.cmpi ne, %1, %c0_i32_0 : i32
    scf.if %2 {
      %cst_17 = arith.constant 0.000000e+00 : f32
      %21 = vector.broadcast %cst_17 : f32 to vector<1x128xf32>
      %c0_18 = arith.constant 0 : index
      %c0_19 = arith.constant 0 : index
      %22 = vector.load %arg6[%c0_18, %c0_19] : memref<1x128xf32, #tpu.memory_space<vmem>>, vector<1x128xf32>
      tpu.vector_store %arg6[%c0_18, %c0_19], %21 {strides = array<i32>} : memref<1x128xf32, #tpu.memory_space<vmem>>, vector<1x128xf32>,
      %cst_20 = arith.constant 0.000000e+00 : f32
      %23 = vector.broadcast %cst_20 : f32 to vector<1x128xf32>
      %c0_21 = arith.constant 0 : index
      %c0_22 = arith.constant 0 : index
      %24 = vector.load %arg7[%c0_21, %c0_22] : memref<1x128xf32, #tpu.memory_space<vmem>>, vector<1x128xf32>
      tpu.vector_store %arg7[%c0_21, %c0_22], %23 {strides = array<i32>} : memref<1x128xf32, #tpu.memory_space<vmem>>, vector<1x128xf32>,
    } else {
    }
    %c0 = arith.constant 0 : index
    %c0_1 = arith.constant 0 : index
    %3 = vector.load %arg1[%c0, %c0_1] : memref<256x36xbf16, #tpu.memory_space<vmem>>, vector<256x36xbf16>
    %c0_2 = arith.constant 0 : index
    %c0_3 = arith.constant 0 : index
    %4 = vector.load %arg2[%c0_2, %c0_3] : memref<36x128xbf16, #tpu.memory_space<vmem>>, vector<36x128xbf16>
    %cst = arith.constant dense<0.000000e+00> : vector<256x128xf32>
    %5 = tpu.matmul %3, %4, %cst {dimension_numbers = #tpu.dot_dimension_numbers<[1], [0], [0], [1], [0, 0, 1, 1], [], []>} : vector<256x36xbf16>, vector<36x128xbf16>, vector<256x128xf32> -> vector<256x128xf32>
    %c0_4 = arith.constant 0 : index
    %c0_5 = arith.constant 0 : index
    %6 = vector.load %arg3[%c0_4, %c0_5] : memref<256x128xf32, #tpu.memory_space<vmem>>, vector<256x128xf32>
    tpu.vector_store %arg3[%c0_4, %c0_5], %5 {strides = array<i32>} : memref<256x128xf32, #tpu.memory_space<vmem>>, vector<256x128xf32>,
    %c0_6 = arith.constant 0 : index
    %c0_7 = arith.constant 0 : index
    %7 = vector.load %arg6[%c0_6, %c0_7] : memref<1x128xf32, #tpu.memory_space<vmem>>, vector<1x128xf32>
    %cst_8 = arith.constant dense<0.000000e+00> : vector<128xf32>
    %8 = vector.multi_reduction <add>, %5, %cst_8 [0] : vector<256x128xf32> to vector<128xf32>
    %9 = vector.shape_cast %8 : vector<128xf32> to vector<1x128xf32>
    %10 = arith.addf %7, %9 : vector<1x128xf32>
    %c0_9 = arith.constant 0 : index
    %c0_10 = arith.constant 0 : index
    %11 = vector.load %arg6[%c0_9, %c0_10] : memref<1x128xf32, #tpu.memory_space<vmem>>, vector<1x128xf32>
    tpu.vector_store %arg6[%c0_9, %c0_10], %10 {strides = array<i32>} : memref<1x128xf32, #tpu.memory_space<vmem>>, vector<1x128xf32>,
    %c0_11 = arith.constant 0 : index
    %c0_12 = arith.constant 0 : index
    %12 = vector.load %arg7[%c0_11, %c0_12] : memref<1x128xf32, #tpu.memory_space<vmem>>, vector<1x128xf32>
    %13 = arith.mulf %5, %5 : vector<256x128xf32>
    %cst_13 = arith.constant dense<0.000000e+00> : vector<128xf32>
    %14 = vector.multi_reduction <add>, %13, %cst_13 [0] : vector<256x128xf32> to vector<128xf32>
    %15 = vector.shape_cast %14 : vector<128xf32> to vector<1x128xf32>
    %16 = arith.addf %12, %15 : vector<1x128xf32>
    %c0_14 = arith.constant 0 : index
    %c0_15 = arith.constant 0 : index
    %17 = vector.load %arg7[%c0_14, %c0_15] : memref<1x128xf32, #tpu.memory_space<vmem>>, vector<1x128xf32>
    tpu.vector_store %arg7[%c0_14, %c0_15], %16 {strides = array<i32>} : memref<1x128xf32, #tpu.memory_space<vmem>>, vector<1x128xf32>,
    %c1_i32 = arith.constant 1 : i32
    %18 = arith.cmpi eq, %arg0, %c1_i32 : i32
    %19 = arith.extui %18 : i1 to i32
    %c0_i32_16 = arith.constant 0 : i32
    %20 = arith.cmpi ne, %19, %c0_i32_16 : i32
    scf.if %20 {
      %c0_17 = arith.constant 0 : index
      %c0_18 = arith.constant 0 : index
      %21 = vector.load %arg6[%c0_17, %c0_18] : memref<1x128xf32, #tpu.memory_space<vmem>>, vector<1x128xf32>
      %c0_19 = arith.constant 0 : index
      %c0_20 = arith.constant 0 : index
      %22 = vector.load %arg4[%c0_19, %c0_20] : memref<1x128xf32, #tpu.memory_space<vmem>>, vector<1x128xf32>
      tpu.vector_store %arg4[%c0_19, %c0_20], %21 {strides = array<i32>} : memref<1x128xf32, #tpu.memory_space<vmem>>, vector<1x128xf32>,
      %c0_21 = arith.constant 0 : index
      %c0_22 = arith.constant 0 : index
      %23 = vector.load %arg7[%c0_21, %c0_22] : memref<1x128xf32, #tpu.memory_space<vmem>>, vector<1x128xf32>
      %c0_23 = arith.constant 0 : index
      %c0_24 = arith.constant 0 : index
      %24 = vector.load %arg5[%c0_23, %c0_24] : memref<1x128xf32, #tpu.memory_space<vmem>>, vector<1x128xf32>
      tpu.vector_store %arg5[%c0_23, %c0_24], %23 {strides = array<i32>} : memref<1x128xf32, #tpu.memory_space<vmem>>, vector<1x128xf32>,
    } else {
    }
    return
  }
  func.func @transform_0(%arg0: i32) -> (i32, i32) {
    %c0_i32 = arith.constant 0 : i32
    %c0_i32_0 = arith.constant 0 : i32
    return %arg0, %c0_i32 : i32, i32
  }
  func.func @transform_1(%arg0: i32) -> (i32, i32) {
    %c0_i32 = arith.constant 0 : i32
    %c0_i32_0 = arith.constant 0 : i32
    %c0_i32_1 = arith.constant 0 : i32
    return %c0_i32, %c0_i32_0 : i32, i32
  }
  func.func @transform_2(%arg0: i32) -> (i32, i32) {
    %c0_i32 = arith.constant 0 : i32
    %c0_i32_0 = arith.constant 0 : i32
    return %arg0, %c0_i32 : i32, i32
  }
  func.func @transform_3(%arg0: i32) -> (i32, i32) {
    %c0_i32 = arith.constant 0 : i32
    %c0_i32_0 = arith.constant 0 : i32
    %c0_i32_1 = arith.constant 0 : i32
    return %c0_i32, %c0_i32_0 : i32, i32
  }
  func.func @transform_4(%arg0: i32) -> (i32, i32) {
    %c0_i32 = arith.constant 0 : i32
    %c0_i32_0 = arith.constant 0 : i32
    %c0_i32_1 = arith.constant 0 : i32
    return %c0_i32, %c0_i32_0 : i32, i32
  }
}

</mosaic_0001>

<llo_original>
// kernel: tpu_custom_call.1
$region0: #{tpu_custom_call.1}
  #allocation0 [shape = 'u32[]', space=smem, size = 0x4, offset = 0x4, fixed_abs, tag = 'smem constant byte address 0x4 - core index']
  #allocation1 [shape = 'u32[72,128]{1,0:T(1,128)}', space=vmem, size = 0x9000, scoped, tag = 'internal scratch']
  #allocation2 [shape = 'f32[1,128]{1,0:T(1,128)}', space=vmem, size = 0x200, scoped, tag = 'scratch operand']
  #allocation3 [shape = 'f32[1,128]{1,0:T(1,128)}', space=vmem, size = 0x200, scoped, tag = 'scratch operand']
  %s0 = inlined_call_operand.vmem [shape: bf16[512,36], index: 0, kind: input, shape index: {}]
  %s1 = inlined_call_operand.vmem [shape: bf16[36,128], index: 1, kind: input, shape index: {}]
  %s2 = inlined_call_operand.hbm [shape: f32[512,128], index: 2, kind: output, shape index: {0}]
  %s3 = inlined_call_operand.hbm [shape: f32[1,128], index: 3, kind: output, shape index: {1}]
  %s4 = inlined_call_operand.hbm [shape: f32[1,128], index: 4, kind: output, shape index: {2}]
  %5 = xla_tuple %s2, %s3, %s4
  %s6 = sld [smem:[#allocation0]]
  $region65: #{tpu_custom_call.1} parent=0
    _
  %s8 = ssub.s32 1, %s6
  %s9 = scalar_select 0, %s8, %s6
  $region1: #{tpu_custom_call.1} parent=0
    #allocation4 [shape = 'u8[262144]{0}', space=vmem, size = 0x40000, scoped, tag = 'output window, operand 0']
    #allocation5 [shape = 's32[2]{0}', space=sflag, size = 0x8, scoped, tag = 'scoped memory for tpu_custom_call.1']
    #allocation6 [shape = 'u8[512]{0}', space=vmem, size = 0x400, scoped, tag = 'output window, operand 1, single buffered']
    #allocation7 [shape = 's32[1]{0}', space=sflag, size = 0x4, scoped, tag = 'scoped memory for tpu_custom_call.1']
    #allocation8 [shape = 'u8[512]{0}', space=vmem, size = 0x400, scoped, tag = 'output window, operand 2, single buffered']
    %10 = vsyncpa [#allocation5], 0
    %s11 = scalar_lea.sflag [#allocation5], 1
    %12 = vsyncpa %s11, 0
    %13 = vsyncpa [#allocation7], 0
    loop: start=0, step=1, limit=4
    $region2: #{tpu_custom_call.1} parent=1 // loop_pre_header
      _
    $region3: #{tpu_custom_call.1} parent=1 // loop_header
      %s15 = sphi 0, %s19
      %p16 = scmp.ge.s32.totalorder %s15, 4
      %s25 = sphi 0, %s27
      %s28 = sphi 0, %s25
      %s29 = sphi 0, %s28
      %s45 = sphi 0, %s29
      %s49 = sphi 0, %s49
      %s51 = sphi 0, %s49
      %s52 = sphi 0, %s51
      %s66 = sphi 0, %s52
      %s72 = sphi 0, %s74
      %s75 = sphi 0, %s72
      %s76 = sphi 0, %s75
      %s92 = sphi 0, %s76
      %s96 = sphi 0, %s96
      %s98 = sphi 0, %s96
      %s99 = sphi 0, %s98
      %s113 = sphi 0, %s99
      %s117 = sphi 0, %s117
      %s119 = sphi 0, %s117
      %s120 = sphi 0, %s119
      %s134 = sphi 0, %s120
    $region4: #{tpu_custom_call.1} parent=1 // loop_header_branch
      %18 = sbr.rel (%p16) target = $region8
    $region5: #{tpu_custom_call.1} parent=1 // loop_body
      %s20 = ssub.s32 %s15, 1
      %s21 = ssub.s32 %s15, 2
      %s22 = sadd.s32 %s15, 1
      %s23 = ssub.s32 %s15, %s22
      %p24 = scmp.eq.s32.totalorder %s23, 0
      %s26 = sadd.s32 %s25, 1
      %s27 = scalar_select %p24, %s25, %s26
      %p30 = pneg %p24
      %p31 = scmp.eq.s32.totalorder %s15, 1
      %p32 = por %p30, %p31
      %p33 = scmp.ne.s32.totalorder %s25, %s28
      %p34 = scmp.eq.s32.totalorder %s15, 0
      %p35 = por %p33, %p34
      %p36 = scmp.ne.s32.totalorder %s25, %s28
      %p37 = scmp.eq.s32.totalorder %s20, 1
      %p38 = por %p36, %p37
      %p39 = scmp.ne.s32.totalorder %s28, %s29
      %p40 = scmp.eq.s32.totalorder %s20, 0
      %p41 = por %p39, %p40
      %p42 = scmp.ne.s32.totalorder %s28, %s29
      %p43 = scmp.eq.s32.totalorder %s21, 1
      %p44 = por %p42, %p43
      %p46 = scmp.ne.s32.totalorder %s29, %s45
      %p47 = scmp.eq.s32.totalorder %s21, 0
      %p48 = por %p46, %p47
      %s50 = sadd.s32 %s49, 1
      %p53 = scmp.eq.s32.totalorder %s15, 1
      %p54 = scmp.ne.s32.totalorder %s49, %s51
      %p55 = scmp.eq.s32.totalorder %s15, 0
      %p56 = por %p54, %p55
      %p57 = scmp.ne.s32.totalorder %s49, %s51
      %p58 = scmp.eq.s32.totalorder %s20, 1
      %p59 = por %p57, %p58
      %p60 = scmp.ne.s32.totalorder %s51, %s52
      %p61 = scmp.eq.s32.totalorder %s20, 0
      %p62 = por %p60, %p61
      %p63 = scmp.ne.s32.totalorder %s51, %s52
      %p64 = scmp.eq.s32.totalorder %s21, 1
      %p65 = por %p63, %p64
      %p67 = scmp.ne.s32.totalorder %s52, %s66
      %p68 = scmp.eq.s32.totalorder %s21, 0
      %p69 = por %p67, %p68
      %s70 = ssub.s32 %s15, %s22
      %p71 = scmp.eq.s32.totalorder %s70, 0
      %s73 = sadd.s32 %s72, 1
      %s74 = scalar_select %p71, %s72, %s73
      %p77 = pneg %p71
      %p78 = scmp.eq.s32.totalorder %s15, 1
      %p79 = por %p77, %p78
      %p80 = scmp.ne.s32.totalorder %s72, %s75
      %p81 = scmp.eq.s32.totalorder %s15, 0
      %p82 = por %p80, %p81
      %p83 = scmp.ne.s32.totalorder %s72, %s75
      %p84 = scmp.eq.s32.totalorder %s20, 1
      %p85 = por %p83, %p84
      %p86 = scmp.ne.s32.totalorder %s75, %s76
      %p87 = scmp.eq.s32.totalorder %s20, 0
      %p88 = por %p86, %p87
      %p89 = scmp.ne.s32.totalorder %s75, %s76
      %p90 = scmp.eq.s32.totalorder %s21, 1
      %p91 = por %p89, %p90
      %p93 = scmp.ne.s32.totalorder %s76, %s92
      %p94 = scmp.eq.s32.totalorder %s21, 0
      %p95 = por %p93, %p94
      %s97 = sadd.s32 %s96, 1
      %p100 = scmp.eq.s32.totalorder %s15, 1
      %p101 = scmp.ne.s32.totalorder %s96, %s98
      %p102 = scmp.eq.s32.totalorder %s15, 0
      %p103 = por %p101, %p102
      %p104 = scmp.ne.s32.totalorder %s96, %s98
      %p105 = scmp.eq.s32.totalorder %s20, 1
      %p106 = por %p104, %p105
      %p107 = scmp.ne.s32.totalorder %s98, %s99
      %p108 = scmp.eq.s32.totalorder %s20, 0
      %p109 = por %p107, %p108
      %p110 = scmp.ne.s32.totalorder %s98, %s99
      %p111 = scmp.eq.s32.totalorder %s21, 1
      %p112 = por %p110, %p111
      %p114 = scmp.ne.s32.totalorder %s99, %s113
      %p115 = scmp.eq.s32.totalorder %s21, 0
      %p116 = por %p114, %p115
      %s118 = sadd.s32 %s117, 1
      %p121 = scmp.eq.s32.totalorder %s15, 1
      %p122 = scmp.ne.s32.totalorder %s117, %s119
      %p123 = scmp.eq.s32.totalorder %s15, 0
      %p124 = por %p122, %p123
      %p125 = scmp.ne.s32.totalorder %s117, %s119
      %p126 = scmp.eq.s32.totalorder %s20, 1
      %p127 = por %p125, %p126
      %p128 = scmp.ne.s32.totalorder %s119, %s120
      %p129 = scmp.eq.s32.totalorder %s20, 0
      %p130 = por %p128, %p129
      %p131 = scmp.ne.s32.totalorder %s119, %s120
      %p132 = scmp.eq.s32.totalorder %s21, 1
      %p133 = por %p131, %p132
      %p135 = scmp.ne.s32.totalorder %s120, %s134
      %p136 = scmp.eq.s32.totalorder %s21, 0
      %p137 = por %p135, %p136
      %p138 = scmp.le.s32.totalorder 1, %s15
      %p139 = scmp.lt.s32.totalorder %s15, 3
      %p140 = pnand %p138, %p139
      %p141 = pneg %p140
      // Predicated region
      $region9: #{tpu_custom_call.1} parent=5 // pred_check
        _
      $region10: #{tpu_custom_call.1} parent=5 // pred_check_branch
        %143 = sbr.rel (%p140) target = $region12
      $region11: #{tpu_custom_call.1} parent=5 // pred_region
        %s144 = ssub.s32 %s15, 1
        // Predicated region
        $region13: #{tpu_custom_call.1} parent=11 // pred_check
          %p145 = pneg %p62
        $region14: #{tpu_custom_call.1} parent=11 // pred_check_branch
          %147 = sbr.rel (%p145) target = $region16
        $region15: #{tpu_custom_call.1} parent=11 // pred_region
          _
        $region16: #{tpu_custom_call.1} parent=11 // pred_fallthru
          _
      $region12: #{tpu_custom_call.1} parent=5 // pred_fallthru
        _
      %p148 = scmp.lt.s32.totalorder %s15, 2
      // Predicated region
      $region17: #{tpu_custom_call.1} parent=5 // pred_check
        %p149 = pneg %p148
      $region18: #{tpu_custom_call.1} parent=5 // pred_check_branch
        %151 = sbr.rel (%p149) target = $region20
      $region19: #{tpu_custom_call.1} parent=5 // pred_region
        // Predicated region
        $region21: #{tpu_custom_call.1} parent=19 // pred_check
          %p152 = pneg %p35
        $region22: #{tpu_custom_call.1} parent=19 // pred_check_branch
          %154 = sbr.rel (%p152) target = $region24
        $region23: #{tpu_custom_call.1} parent=19 // pred_region
          %s155 = smul.u32 32, %s15
          %p156 = scmp.lt.s32.totalorder %s155, 63
          %s157 = scalar_select %p156, %s155, 63
          %s158 = smul.addr %s157, 4
          %s159 = scalar_lea.vmem %s0, %s158
          %s160 = smul.u32 32, %s15
        $region24: #{tpu_custom_call.1} parent=19 // pred_fallthru
          _
      $region20: #{tpu_custom_call.1} parent=5 // pred_fallthru
        _
      %p161 = scmp.le.s32.totalorder 1, %s15
      %p162 = scmp.lt.s32.totalorder %s15, 3
      %p163 = pnand %p161, %p162
      %p164 = pneg %p163
      // Predicated region
      $region25: #{tpu_custom_call.1} parent=5 // pred_check
        _
      $region26: #{tpu_custom_call.1} parent=5 // pred_check_branch
        %166 = sbr.rel (%p163) target = $region28
      $region27: #{tpu_custom_call.1} parent=5 // pred_region
        %s167 = ssub.s32 %s15, 1
        %s168 = smul.u32 32, %s20
        %p169 = scmp.lt.s32.totalorder %s168, 63
        %s170 = scalar_select %p169, %s168, 63
        %s171 = smul.addr %s170, 4
        %s172 = scalar_lea.vmem %s0, %s171
        %p173 = pneg %p41
        %p174 = pneg %p38
        %p175 = pneg %p62
        %p176 = pneg %p59
        %p177 = pneg %p88
        %p178 = pneg %p85
        %s179 = sand.u32 %s75, 1
        %s180 = scalar_lea.sflag [#allocation5], %s179
        %s181 = sand.u32 %s75, 1
        %s182 = smul.addr %s181, 256
        %s183 = scalar_lea.vmem [#allocation4], %s182
        %p184 = pneg %p109
        %p185 = pneg %p106
        %p186 = pneg %p130
        %p187 = pneg %p127
        %s188 = smul.u32 32, %s20
        %p189 = scmp.lt.s32.totalorder %s188, 63
        %s190 = scalar_select %p189, %s188, 63
        %s191 = smul.addr %s190, 4
        %s192 = scalar_lea.vmem %s0, %s191
        %s193 = smul.u32 32, %s20
        %s194 = smul.u32 32, %s20
        %p196 = scmp.eq.s32.totalorder %s20, 0
        // Predicated region
        $region29: #{tpu_custom_call.1} parent=27 // pred_check
          %p197 = pneg %p196
        $region30: #{tpu_custom_call.1} parent=27 // pred_check_branch
          %199 = sbr.rel (%p197) target = $region32
        $region31: #{tpu_custom_call.1} parent=27 // pred_region
          %200 = vst [vmem:[#allocation2] sm:$0x1] 0.0
          %201 = vst [vmem:[#allocation3] sm:$0x1] 0.0
        $region32: #{tpu_custom_call.1} parent=27 // pred_fallthru
          _
        %v202 = vld [vmem:[%s192] sm:$0xf]
        %v203 = vld [vmem:[%s192 + $0x4] sm:$0xf]
        %v204 = vld [vmem:[%s192 + $0x8] sm:$0xf]
        %v205 = vld [vmem:[%s192 + $0xc] sm:$0xf]
        %v206 = vld [vmem:[%s192 + $0x10] sm:$0xf]
        %v207 = vld [vmem:[%s192 + $0x14] sm:$0xf]
        %v208 = vld [vmem:[%s192 + $0x18] sm:$0xf]
        %v209 = vld [vmem:[%s192 + $0x1c] sm:$0xf]
        %v210 = vld [vmem:[%s192 + $0x20] sm:$0xf]
        %v211 = vld [vmem:[%s192 + $0x24] sm:$0xf]
        %v212 = vld [vmem:[%s192 + $0x28] sm:$0xf]
        %v213 = vld [vmem:[%s192 + $0x2c] sm:$0xf]
        %v214 = vld [vmem:[%s192 + $0x30] sm:$0xf]
        %v215 = vld [vmem:[%s192 + $0x34] sm:$0xf]
        %v216 = vld [vmem:[%s192 + $0x38] sm:$0xf]
        %v217 = vld [vmem:[%s192 + $0x3c] sm:$0xf]
        %v218 = vld [vmem:[%s192 + $0x40] sm:$0xf]
        %v219 = vld [vmem:[%s192 + $0x44] sm:$0xf]
        %v220 = vld [vmem:[%s192 + $0x48] sm:$0xf]
        %v221 = vld [vmem:[%s192 + $0x4c] sm:$0xf]
        %v222 = vld [vmem:[%s192 + $0x50] sm:$0xf]
        %v223 = vld [vmem:[%s192 + $0x54] sm:$0xf]
        %v224 = vld [vmem:[%s192 + $0x58] sm:$0xf]
        %v225 = vld [vmem:[%s192 + $0x5c] sm:$0xf]
        %v226 = vld [vmem:[%s192 + $0x60] sm:$0xf]
        %v227 = vld [vmem:[%s192 + $0x64] sm:$0xf]
        %v228 = vld [vmem:[%s192 + $0x68] sm:$0xf]
        %v229 = vld [vmem:[%s192 + $0x6c] sm:$0xf]
        %v230 = vld [vmem:[%s192 + $0x70] sm:$0xf]
        %v231 = vld [vmem:[%s192 + $0x74] sm:$0xf]
        %v232 = vld [vmem:[%s192 + $0x78] sm:$0xf]
        %v233 = vld [vmem:[%s192 + $0x7c] sm:$0xf]
        %v234 = vld [vmem:[%s1] sm:$0xf]
        %v235 = vld [vmem:[%s1 + $0x4] sm:$0xf]
        %v236 = vld [vmem:[%s1 + $0x8] sm:$0xf]
        %v237 = vld [vmem:[%s1 + $0xc] sm:$0xf]
        %v238 = vld [vmem:[%s1 + $0x10] sm:$0x3]
        %v271 = vunpack.c.l.b16 %v202
        %v272 = vunpack.c.l.b16 %v203
        %v273 = vunpack.c.l.b16 %v204
        %v274 = vunpack.c.l.b16 %v205
        %v275 = vunpack.c.l.b16 %v206
        %v276 = vunpack.c.l.b16 %v207
        %v277 = vunpack.c.l.b16 %v208
        %v278 = vunpack.c.l.b16 %v209
        %v279 = vunpack.c.l.b16 %v210
        %v280 = vunpack.c.l.b16 %v211
        %v281 = vunpack.c.l.b16 %v212
        %v282 = vunpack.c.l.b16 %v213
        %v283 = vunpack.c.l.b16 %v214
        %v284 = vunpack.c.l.b16 %v215
        %v285 = vunpack.c.l.b16 %v216
        %v286 = vunpack.c.l.b16 %v217
        %v287 = vunpack.c.l.b16 %v218
        %v288 = vunpack.c.l.b16 %v219
        %v289 = vunpack.c.l.b16 %v220
        %v290 = vunpack.c.l.b16 %v221
        %v291 = vunpack.c.l.b16 %v222
        %v292 = vunpack.c.l.b16 %v223
        %v293 = vunpack.c.l.b16 %v224
        %v294 = vunpack.c.l.b16 %v225
        %v295 = vunpack.c.l.b16 %v226
        %v296 = vunpack.c.l.b16 %v227
        %v297 = vunpack.c.l.b16 %v228
        %v298 = vunpack.c.l.b16 %v229
        %v299 = vunpack.c.l.b16 %v230
        %v300 = vunpack.c.l.b16 %v231
        %v301 = vunpack.c.l.b16 %v232
        %v302 = vunpack.c.l.b16 %v233
        %v303 = vpack.c.b16 %v272, %v271
        %v304 = vpack.c.b16 %v274, %v273
        %v305 = vpack.c.b16 %v276, %v275
        %v306 = vpack.c.b16 %v278, %v277
        %v307 = vpack.c.b16 %v280, %v279
        %v308 = vpack.c.b16 %v282, %v281
        %v309 = vpack.c.b16 %v284, %v283
        %v310 = vpack.c.b16 %v286, %v285
        %v311 = vpack.c.b16 %v288, %v287
        %v312 = vpack.c.b16 %v290, %v289
        %v313 = vpack.c.b16 %v292, %v291
        %v314 = vpack.c.b16 %v294, %v293
        %v315 = vpack.c.b16 %v296, %v295
        %v316 = vpack.c.b16 %v298, %v297
        %v317 = vpack.c.b16 %v300, %v299
        %v318 = vpack.c.b16 %v302, %v301
        %v324 = vunpack.c.l.b16 %v234
        %v325 = vunpack.c.l.b16 %v235
        %v326 = vunpack.c.l.b16 %v236
        %v327 = vunpack.c.l.b16 %v237
        %v328 = vunpack.c.l.b16 %v238
        %v329 = vpack.c.b16 %v325, %v324
        %v330 = vpack.c.b16 %v327, %v326
        %v331 = vpack.c.b16 %v328, %v328
        %vm334 = vcmask 293888
        %v336 = vsel %vm334, %v303, 0
        %v339 = vsel %vm334, %v304, 0
        %v342 = vsel %vm334, %v305, 0
        %v345 = vsel %vm334, %v306, 0
        %v348 = vsel %vm334, %v307, 0
        %v351 = vsel %vm334, %v308, 0
        %v354 = vsel %vm334, %v309, 0
        %v357 = vsel %vm334, %v310, 0
        %v360 = vsel %vm334, %v311, 0
        %v363 = vsel %vm334, %v312, 0
        %v366 = vsel %vm334, %v313, 0
        %v369 = vsel %vm334, %v314, 0
        %v372 = vsel %vm334, %v315, 0
        %v375 = vsel %vm334, %v316, 0
        %v378 = vsel %vm334, %v317, 0
        %v381 = vsel %vm334, %v318, 0
        %vm383 = vcmask 1041408
        %v385 = vsel %vm383, %v331, 0
        %387 = vmatpush.bf16.msra.mxu0 0
        %388 = vmatpush.bf16.msra.mxu0 0
        %389 = vmatpush.bf16.msra.mxu0 0
        %390 = vmatpush.bf16.msra.mxu0 0
        %391 = vmatpush.bf16.msra.mxu0 0
        %392 = vmatpush.bf16.msra.mxu0 %v385
        %393 = vmatpush.bf16.msra.mxu0 %v330
        %394 = vmatpush.bf16.msra.mxu0 %v329
        %395 = vmatmul.bf16.gmra.mxu0 %v336
        %v396 = vpop.f32.mrf.mxu0
        %v397 = vadd.f32 0.0, %v396
        %v398 = vpop.f32.mrf.mxu0
        %v399 = vadd.f32 0.0, %v398
        %400 = vmatmul.bf16.gmra.mxu0 %v339
        %v401 = vpop.f32.mrf.mxu0
        %v402 = vadd.f32 0.0, %v401
        %v403 = vpop.f32.mrf.mxu0
        %v404 = vadd.f32 0.0, %v403
        %405 = vmatmul.bf16.gmra.mxu0 %v342
        %v406 = vpop.f32.mrf.mxu0
        %v407 = vadd.f32 0.0, %v406
        %v408 = vpop.f32.mrf.mxu0
        %v409 = vadd.f32 0.0, %v408
        %410 = vmatmul.bf16.gmra.mxu0 %v345
        %v411 = vpop.f32.mrf.mxu0
        %v412 = vadd.f32 0.0, %v411
        %v413 = vpop.f32.mrf.mxu0
        %v414 = vadd.f32 0.0, %v413
        %415 = vmatmul.bf16.gmra.mxu0 %v348
        %v416 = vpop.f32.mrf.mxu0
        %v417 = vadd.f32 0.0, %v416
        %v418 = vpop.f32.mrf.mxu0
        %v419 = vadd.f32 0.0, %v418
        %420 = vmatmul.bf16.gmra.mxu0 %v351
        %v421 = vpop.f32.mrf.mxu0
        %v422 = vadd.f32 0.0, %v421
        %v423 = vpop.f32.mrf.mxu0
        %v424 = vadd.f32 0.0, %v423
        %425 = vmatmul.bf16.gmra.mxu0 %v354
        %v426 = vpop.f32.mrf.mxu0
        %v427 = vadd.f32 0.0, %v426
        %v428 = vpop.f32.mrf.mxu0
        %v429 = vadd.f32 0.0, %v428
        %430 = vmatmul.bf16.gmra.mxu0 %v357
        %v431 = vpop.f32.mrf.mxu0
        %v432 = vadd.f32 0.0, %v431
        %v433 = vpop.f32.mrf.mxu0
        %v434 = vadd.f32 0.0, %v433
        %435 = vmatmul.bf16.gmra.mxu0 %v360
        %v436 = vpop.f32.mrf.mxu0
        %v437 = vadd.f32 0.0, %v436
        %v438 = vpop.f32.mrf.mxu0
        %v439 = vadd.f32 0.0, %v438
        %440 = vmatmul.bf16.gmra.mxu0 %v363
        %v441 = vpop.f32.mrf.mxu0
        %v442 = vadd.f32 0.0, %v441
        %v443 = vpop.f32.mrf.mxu0
        %v444 = vadd.f32 0.0, %v443
        %445 = vmatmul.bf16.gmra.mxu0 %v366
        %v446 = vpop.f32.mrf.mxu0
        %v447 = vadd.f32 0.0, %v446
        %v448 = vpop.f32.mrf.mxu0
        %v449 = vadd.f32 0.0, %v448
        %450 = vmatmul.bf16.gmra.mxu0 %v369
        %v451 = vpop.f32.mrf.mxu0
        %v452 = vadd.f32 0.0, %v451
        %v453 = vpop.f32.mrf.mxu0
        %v454 = vadd.f32 0.0, %v453
        %455 = vmatmul.bf16.gmra.mxu0 %v372
        %v456 = vpop.f32.mrf.mxu0
        %v457 = vadd.f32 0.0, %v456
        %v458 = vpop.f32.mrf.mxu0
        %v459 = vadd.f32 0.0, %v458
        %460 = vmatmul.bf16.gmra.mxu0 %v375
        %v461 = vpop.f32.mrf.mxu0
        %v462 = vadd.f32 0.0, %v461
        %v463 = vpop.f32.mrf.mxu0
        %v464 = vadd.f32 0.0, %v463
        %465 = vmatmul.bf16.gmra.mxu0 %v378
        %v466 = vpop.f32.mrf.mxu0
        %v467 = vadd.f32 0.0, %v466
        %v468 = vpop.f32.mrf.mxu0
        %v469 = vadd.f32 0.0, %v468
        %470 = vmatmul.bf16.gmra.mxu0 %v381
        %v471 = vpop.f32.mrf.mxu0
        %v472 = vadd.f32 0.0, %v471
        %v473 = vpop.f32.mrf.mxu0
        %v474 = vadd.f32 0.0, %v473
        %475 = vdwg.mxu0
        %476 = vst [vmem:[%s183] sm:$0xff] %v397
        %477 = vst [vmem:[%s183 + $0x8] sm:$0xff] %v399
        %478 = vst [vmem:[%s183 + $0x10] sm:$0xff] %v402
        %479 = vst [vmem:[%s183 + $0x18] sm:$0xff] %v404
        %480 = vst [vmem:[%s183 + $0x20] sm:$0xff] %v407
        %481 = vst [vmem:[%s183 + $0x28] sm:$0xff] %v409
        %482 = vst [vmem:[%s183 + $0x30] sm:$0xff] %v412
        %483 = vst [vmem:[%s183 + $0x38] sm:$0xff] %v414
        %484 = vst [vmem:[%s183 + $0x40] sm:$0xff] %v417
        %485 = vst [vmem:[%s183 + $0x48] sm:$0xff] %v419
        %486 = vst [vmem:[%s183 + $0x50] sm:$0xff] %v422
        %487 = vst [vmem:[%s183 + $0x58] sm:$0xff] %v424
        %488 = vst [vmem:[%s183 + $0x60] sm:$0xff] %v427
        %489 = vst [vmem:[%s183 + $0x68] sm:$0xff] %v429
        %490 = vst [vmem:[%s183 + $0x70] sm:$0xff] %v432
        %491 = vst [vmem:[%s183 + $0x78] sm:$0xff] %v434
        %492 = vst [vmem:[%s183 + $0x80] sm:$0xff] %v437
        %493 = vst [vmem:[%s183 + $0x88] sm:$0xff] %v439
        %494 = vst [vmem:[%s183 + $0x90] sm:$0xff] %v442
        %495 = vst [vmem:[%s183 + $0x98] sm:$0xff] %v444
        %496 = vst [vmem:[%s183 + $0xa0] sm:$0xff] %v447
        %497 = vst [vmem:[%s183 + $0xa8] sm:$0xff] %v449
        %498 = vst [vmem:[%s183 + $0xb0] sm:$0xff] %v452
        %499 = vst [vmem:[%s183 + $0xb8] sm:$0xff] %v454
        %500 = vst [vmem:[%s183 + $0xc0] sm:$0xff] %v457
        %501 = vst [vmem:[%s183 + $0xc8] sm:$0xff] %v459
        %502 = vst [vmem:[%s183 + $0xd0] sm:$0xff] %v462
        %503 = vst [vmem:[%s183 + $0xd8] sm:$0xff] %v464
        %504 = vst [vmem:[%s183 + $0xe0] sm:$0xff] %v467
        %505 = vst [vmem:[%s183 + $0xe8] sm:$0xff] %v469
        %506 = vst [vmem:[%s183 + $0xf0] sm:$0xff] %v472
        %507 = vst [vmem:[%s183 + $0xf8] sm:$0xff] %v474
        %v508 = vld [vmem:[#allocation2] sm:$0x1]
        %v509 = vadd.f32 %v397, %v399
        %v510 = vadd.f32 %v509, %v402
        %v511 = vadd.f32 %v510, %v404
        %v512 = vadd.f32 %v511, %v407
        %v513 = vadd.f32 %v512, %v409
        %v514 = vadd.f32 %v513, %v412
        %v515 = vadd.f32 %v514, %v414
        %v516 = vadd.f32 %v515, %v417
        %v517 = vadd.f32 %v516, %v419
        %v518 = vadd.f32 %v517, %v422
        %v519 = vadd.f32 %v518, %v424
        %v520 = vadd.f32 %v519, %v427
        %v521 = vadd.f32 %v520, %v429
        %v522 = vadd.f32 %v521, %v432
        %v523 = vadd.f32 %v522, %v434
        %v524 = vadd.f32 %v523, %v437
        %v525 = vadd.f32 %v524, %v439
        %v526 = vadd.f32 %v525, %v442
        %v527 = vadd.f32 %v526, %v444
        %v528 = vadd.f32 %v527, %v447
        %v529 = vadd.f32 %v528, %v449
        %v530 = vadd.f32 %v529, %v452
        %v531 = vadd.f32 %v530, %v454
        %v532 = vadd.f32 %v531, %v457
        %v533 = vadd.f32 %v532, %v459
        %v534 = vadd.f32 %v533, %v462
        %v535 = vadd.f32 %v534, %v464
        %v536 = vadd.f32 %v535, %v467
        %v537 = vadd.f32 %v536, %v469
        %v538 = vadd.f32 %v537, %v472
        %v539 = vadd.f32 %v538, %v474
        %v540 = vrot.slane %v539, 4
        %v541 = vadd.f32 %v539, %v540
        %v542 = vrot.slane %v541, 2
        %v543 = vadd.f32 %v541, %v542
        %v544 = vrot.slane %v543, 1
        %v545 = vadd.f32 %v543, %v544
        %v546 = vadd.f32 %v508, %v545
        %547 = vst [vmem:[#allocation2] sm:$0x1] %v546
        %v548 = vld [vmem:[#allocation3] sm:$0x1]
        %v549 = vmul.f32 %v397, %v397
        %v550 = vmul.f32 %v399, %v399
        %v551 = vmul.f32 %v402, %v402
        %v552 = vmul.f32 %v404, %v404
        %v553 = vmul.f32 %v407, %v407
        %v554 = vmul.f32 %v409, %v409
        %v555 = vmul.f32 %v412, %v412
        %v556 = vmul.f32 %v414, %v414
        %v557 = vmul.f32 %v417, %v417
        %v558 = vmul.f32 %v419, %v419
        %v559 = vmul.f32 %v422, %v422
        %v560 = vmul.f32 %v424, %v424
        %v561 = vmul.f32 %v427, %v427
        %v562 = vmul.f32 %v429, %v429
        %v563 = vmul.f32 %v432, %v432
        %v564 = vmul.f32 %v434, %v434
        %v565 = vmul.f32 %v437, %v437
        %v566 = vmul.f32 %v439, %v439
        %v567 = vmul.f32 %v442, %v442
        %v568 = vmul.f32 %v444, %v444
        %v569 = vmul.f32 %v447, %v447
        %v570 = vmul.f32 %v449, %v449
        %v571 = vmul.f32 %v452, %v452
        %v572 = vmul.f32 %v454, %v454
        %v573 = vmul.f32 %v457, %v457
        %v574 = vmul.f32 %v459, %v459
        %v575 = vmul.f32 %v462, %v462
        %v576 = vmul.f32 %v464, %v464
        %v577 = vmul.f32 %v467, %v467
        %v578 = vmul.f32 %v469, %v469
        %v579 = vmul.f32 %v472, %v472
        %v580 = vmul.f32 %v474, %v474
        %v581 = vadd.f32 %v549, %v550
        %v582 = vadd.f32 %v581, %v551
        %v583 = vadd.f32 %v582, %v552
        %v584 = vadd.f32 %v583, %v553
        %v585 = vadd.f32 %v584, %v554
        %v586 = vadd.f32 %v585, %v555
        %v587 = vadd.f32 %v586, %v556
        %v588 = vadd.f32 %v587, %v557
        %v589 = vadd.f32 %v588, %v558
        %v590 = vadd.f32 %v589, %v559
        %v591 = vadd.f32 %v590, %v560
        %v592 = vadd.f32 %v591, %v561
        %v593 = vadd.f32 %v592, %v562
        %v594 = vadd.f32 %v593, %v563
        %v595 = vadd.f32 %v594, %v564
        %v596 = vadd.f32 %v595, %v565
        %v597 = vadd.f32 %v596, %v566
        %v598 = vadd.f32 %v597, %v567
        %v599 = vadd.f32 %v598, %v568
        %v600 = vadd.f32 %v599, %v569
        %v601 = vadd.f32 %v600, %v570
        %v602 = vadd.f32 %v601, %v571
        %v603 = vadd.f32 %v602, %v572
        %v604 = vadd.f32 %v603, %v573
        %v605 = vadd.f32 %v604, %v574
        %v606 = vadd.f32 %v605, %v575
        %v607 = vadd.f32 %v606, %v576
        %v608 = vadd.f32 %v607, %v577
        %v609 = vadd.f32 %v608, %v578
        %v610 = vadd.f32 %v609, %v579
        %v611 = vadd.f32 %v610, %v580
        %v612 = vrot.slane %v611, 4
        %v613 = vadd.f32 %v611, %v612
        %v614 = vrot.slane %v613, 2
        %v615 = vadd.f32 %v613, %v614
        %v616 = vrot.slane %v615, 1
        %v617 = vadd.f32 %v615, %v616
        %v618 = vadd.f32 %v548, %v617
        %619 = vst [vmem:[#allocation3] sm:$0x1] %v618
        %p620 = scmp.eq.s32.totalorder %s20, 1
        // Predicated region
        $region33: #{tpu_custom_call.1} parent=27 // pred_check
          %p621 = pneg %p620
        $region34: #{tpu_custom_call.1} parent=27 // pred_check_branch
          %623 = sbr.rel (%p621) target = $region36
        $region35: #{tpu_custom_call.1} parent=27 // pred_region
          %v624 = vld [vmem:[#allocation2] sm:$0x1]
          %625 = vst [vmem:[#allocation6] sm:$0x1] %v624
          %v626 = vld [vmem:[#allocation3] sm:$0x1]
          %627 = vst [vmem:[#allocation8] sm:$0x1] %v626
        $region36: #{tpu_custom_call.1} parent=27 // pred_fallthru
          _
        %s628 = sand.u32 %s75, 1
        %s629 = scalar_lea.sflag [#allocation5], %s628
        %s630 = sand.u32 %s75, 1
        %s631 = smul.addr %s630, 256
        %s632 = scalar_lea.vmem [#allocation4], %s631
        // Predicated region
        $region37: #{tpu_custom_call.1} parent=27 // pred_check
          %p633 = pneg %p85
        $region38: #{tpu_custom_call.1} parent=27 // pred_check_branch
          %635 = sbr.rel (%p633) target = $region40
        $region39: #{tpu_custom_call.1} parent=27 // pred_region
          %s636 = smul.u32 32, %s20
          %638 = vsyncadd %s629, 0
          %s639 = smul.addr %s636, 8
          %s640 = scalar_lea.hbm %s2, %s639
          %s641 = sshll.u32 %s632, 4
          %s642 = int_to_ptr.vmem [resolvable:$true] %s641
          %s643 = sshll.u32 %s640, 4
          %s644 = int_to_ptr.hbm [resolvable:$true] %s643
          %649 = dma.vmem_to_hbm [thread:$0]  %s642, 4096, %s644, %s629, 128, 128, 8
        $region40: #{tpu_custom_call.1} parent=27 // pred_fallthru
          _
        // Predicated region
        $region41: #{tpu_custom_call.1} parent=27 // pred_check
          %p650 = pneg %p106
        $region42: #{tpu_custom_call.1} parent=27 // pred_check_branch
          %652 = sbr.rel (%p650) target = $region44
        $region43: #{tpu_custom_call.1} parent=27 // pred_region
          %654 = vsyncadd [#allocation7], 0
          %s656 = sshll.u32 [#allocation6], 4
          %s657 = int_to_ptr.vmem [resolvable:$true] %s656
          %s658 = sshll.u32 %s3, 4
          %s659 = int_to_ptr.hbm [resolvable:$true] %s658
          %661 = dma.vmem_to_hbm [thread:$0]  %s657, 16, %s659, [#allocation7]
        $region44: #{tpu_custom_call.1} parent=27 // pred_fallthru
          _
        // Predicated region
        $region45: #{tpu_custom_call.1} parent=27 // pred_check
          %p662 = pneg %p127
        $region46: #{tpu_custom_call.1} parent=27 // pred_check_branch
          %664 = sbr.rel (%p662) target = $region48
        $region47: #{tpu_custom_call.1} parent=27 // pred_region
          %666 = vsyncadd [#allocation7], 0
          %s668 = sshll.u32 [#allocation8], 4
          %s669 = int_to_ptr.vmem [resolvable:$true] %s668
          %s670 = sshll.u32 %s4, 4
          %s671 = int_to_ptr.hbm [resolvable:$true] %s670
          %673 = dma.vmem_to_hbm [thread:$0]  %s669, 16, %s671, [#allocation7]
        $region48: #{tpu_custom_call.1} parent=27 // pred_fallthru
          _
        // Predicated region
        $region49: #{tpu_custom_call.1} parent=27 // pred_check
          %p674 = pneg %p106
        $region50: #{tpu_custom_call.1} parent=27 // pred_check_branch
          %676 = sbr.rel (%p674) target = $region52
        $region51: #{tpu_custom_call.1} parent=27 // pred_region
          %678 = dma.done [#allocation7], 16
        $region52: #{tpu_custom_call.1} parent=27 // pred_fallthru
          _
        // Predicated region
        $region53: #{tpu_custom_call.1} parent=27 // pred_check
          %p679 = pneg %p127
        $region54: #{tpu_custom_call.1} parent=27 // pred_check_branch
          %681 = sbr.rel (%p679) target = $region56
        $region55: #{tpu_custom_call.1} parent=27 // pred_region
          %683 = dma.done [#allocation7], 16
        $region56: #{tpu_custom_call.1} parent=27 // pred_fallthru
          _
      $region28: #{tpu_custom_call.1} parent=5 // pred_fallthru
        _
      %p684 = scmp.le.s32.totalorder 2, %s15
      // Predicated region
      $region57: #{tpu_custom_call.1} parent=5 // pred_check
        %p685 = pneg %p684
      $region58: #{tpu_custom_call.1} parent=5 // pred_check_branch
        %687 = sbr.rel (%p685) target = $region60
      $region59: #{tpu_custom_call.1} parent=5 // pred_region
        %s688 = ssub.s32 %s15, 2
        // Predicated region
        $region61: #{tpu_custom_call.1} parent=59 // pred_check
          %p689 = pneg %p91
        $region62: #{tpu_custom_call.1} parent=59 // pred_check_branch
          %691 = sbr.rel (%p689) target = $region64
        $region63: #{tpu_custom_call.1} parent=59 // pred_region
          %s692 = sand.u32 %s76, 1
          %s693 = scalar_lea.sflag [#allocation5], %s692
          %s694 = sand.u32 %s76, 1
          %s695 = smul.addr %s694, 256
          %s696 = scalar_lea.vmem [#allocation4], %s695
          %698 = dma.done %s693, 4096
        $region64: #{tpu_custom_call.1} parent=59 // pred_fallthru
          _
      $region60: #{tpu_custom_call.1} parent=5 // pred_fallthru
        _
    $region6: #{tpu_custom_call.1} parent=1 // loop_footer
      %s19 = sadd.s32 1, %s15
    $region7: #{tpu_custom_call.1} parent=1 // loop_footer_branch
      %14 = sbr.rel target = $region3
    $region8: #{tpu_custom_call.1} parent=1 // loop_exit
      _
    %699 = vsyncpa [#allocation5], 1
    %s700 = scalar_lea.sflag [#allocation5], 1
    %701 = vsyncpa %s700, 1
    %702 = vsyncpa [#allocation7], 1

</llo_original>
